<compile_context>
chip_gen: v6e
topology: v6e:2x2x1
jax: 0.10.0
libtpu: 0.0.40
codegen_flags: <defaults>
</compile_context>

<pallas_src>
import functools

import jax
import jax.numpy as jnp
from jax import lax
from jax.experimental import pallas as pl
from jax.experimental.pallas import tpu as pltpu


def _round_up(x, m):
    return (x + m - 1) // m * m


# ----------------------------------------------------------------------------
# Pallas kernel:  relu(x@W1 + t1) -> relu(.@W2 + t2) -> tanh(. · w3 + b3)
# ----------------------------------------------------------------------------
def _value_head_kernel(x_ref, w1_ref, w2_ref, w3_ref, shift_ref, o_ref,
                       *, n1, n2, num_out, off2, off3):
    t1 = shift_ref[:, 0:n1]                   # [1, 9F]   conv bias + BN1 shift (folded)
    t2 = shift_ref[:, off2:off2 + n2]         # [1, 2F]   linear_2 bias + BN2 shift (folded)
    b3 = shift_ref[:, off3:off3 + num_out]    # [1, num_out] linear_3 bias

    # x arrives in f32; cast to the MXU dtype in-kernel (VPU has slack) instead of a
    # wrapper-side astype pass over the whole batch in HBM.
    xb = x_ref[...].astype(w1_ref.dtype)

    # conv1 (as dense matmul, BN1 scale folded into w1) + relu_1
    h = jnp.dot(xb, w1_ref[...], preferred_element_type=jnp.float32) + t1
    h = jnp.maximum(h, 0.0)

    # flatten_2 is a layout choice baked into w2; linear_2 (BN2 scale folded) + relu_2.
    # dropout_2: identity (eval mode).
    h = jnp.dot(h.astype(w2_ref.dtype), w2_ref[...],
                preferred_element_type=jnp.float32) + t2
    h = jnp.maximum(h, 0.0)                   # [tb, 2F] f32

    # linear_3 + tanh_3. For tiny num_out (the value head: num_out == 1) the 2F -> num_out
    # projection runs on the VPU (broadcast multiply) + XLU (lane reduction) so it does
    # not consume MXU pushes; output stays in the natural [tb, num_out] layout.
    if num_out <= 8:
        w3 = w3_ref[...]                      # [num_out, 2F] f32
        cols = [jnp.sum(h * w3[o:o + 1, :], axis=-1, keepdims=True)
                for o in range(num_out)]
        out = cols[0] if num_out == 1 else jnp.concatenate(cols, axis=-1)
    else:
        out = lax.dot_general(h.astype(w3_ref.dtype), w3_ref[...],
                              (((1,), (1,)), ((), ())),
                              preferred_element_type=jnp.float32)
    o_ref[...] = jnp.tanh(out + b3)           # [tb, num_out]


# ----------------------------------------------------------------------------
# One-time parameter preprocessing (hoisted out of the per-call path)
# ----------------------------------------------------------------------------
def prepare_value_head_params(p, *, dtype=jnp.bfloat16, eps=1e-5):
    """Build the packed/folded kernel weights once. Call outside the hot loop."""
    conv_w = p["conv_w"].astype(jnp.float32)
    F, Cin = conv_w.shape[0], conv_w.shape[1]
    K, n1, n2 = Cin * 9, 9 * F, p["w2"].shape[0]
    num_out = p["w3"].shape[0]

    # Fold BatchNorms (eval mode): y = v*scale + shift
    s1 = p["gamma1"] / jnp.sqrt(p["var1"] + eps)
    t1 = p["beta1"] - p["mean1"] * s1
    s2 = p["gamma2"] / jnp.sqrt(p["var2"] + eps)
    t2 = p["beta2"] - p["mean2"] * s2

    # conv (3x3, pad=1, 3x3 board) as a dense [Cin*9, 9F] weight.  Column = s*F + f
    # (spatial-major), row = c*9 + r*3 + q = the natural NCHW flatten of the board.
    wp = jnp.pad(conv_w, ((0, 0), (0, 0), (1, 1), (1, 1)))       # [F, Cin, 5, 5]
    blocks = []
    for i in range(3):
        for j in range(3):
            blk = wp[:, :, 2 - i:5 - i, 2 - j:5 - j]             # [F, Cin, 3, 3]
            blocks.append(blk.reshape(F, K).T)                   # [Cin*9, F]
    w1_eff = jnp.concatenate(blocks, axis=1)                     # [Cin*9, 9F]
    w1_eff = w1_eff * jnp.tile(s1, 9)[None, :]                   # fold BN1 scale
    t1_full = jnp.tile(p["conv_b"] * s1 + t1, 9)                 # [9F] folded shift

    # linear_2: PyTorch channel-major flatten index f*9+s -> our layout s*F+f;
    # fold BN2 scale into the weight.
    w2_p = p["w2"].T.reshape(F, 9, n2).transpose(1, 0, 2).reshape(n1, n2)
    w2_p = w2_p * s2[None, :]
    t2_full = p["b2"] * s2 + t2                                  # [2F]

    # Pack t1 / t2 / b3 into one small input (128-aligned segments) -> fewer tiny DMAs.
    off2 = _round_up(n1, 128)
    off3 = off2 + _round_up(n2, 128)
    shift = jnp.zeros((1, off3 + _round_up(num_out, 128)), jnp.float32)
    shift = (shift.at[0, :n1].set(t1_full)
                  .at[0, off2:off2 + n2].set(t2_full)
                  .at[0, off3:off3 + num_out].set(p["b3"].astype(jnp.float32)))

    return {
        "w1": w1_eff.astype(dtype),
        "w2": w2_p.astype(dtype),
        "w3": p["w3"].astype(jnp.float32),    # stays f32: layer 3 runs on VPU/XLU
        "shift": shift,                       # f32
    }


# ----------------------------------------------------------------------------
# Forward wrapper: batch-tiled pallas_call with resident weights
# ----------------------------------------------------------------------------
def value_head_forward(x, prepped, *, block_b=4096):
    """x: [B, Cin, 3, 3] NCHW (f32) -> [B, num_out] f32.  block_b: multiple of 512."""
    w1, w2, w3, shift = prepped["w1"], prepped["w2"], prepped["w3"], prepped["shift"]

    B = x.shape[0]
    K, n1 = w1.shape
    n2 = w2.shape[1]
    num_out = w3.shape[0]
    off2 = _round_up(n1, 128)
    off3 = off2 + _round_up(n2, 128)

    # Flatten the board: contiguous NCHW reshape (metadata only, no HBM pass); row
    # index c*9 + i*3 + j matches w1's row layout. No dtype cast and no batch pad here.
    xf = x.reshape(B, K)

    # Batch tile: big enough to amortize the ~0.35us per-grid-step overhead, but for
    # large batches guarantee >= 2 tiles so the "parallel" axis can be sharded across
    # both v7x TensorCores. Small batches use a single full-array tile.
    if B <= 1024:
        tb = B
    else:
        tb = _round_up(min(block_b, _round_up(pl.cdiv(B, 2), 512)), 8)
    grid = pl.cdiv(B, tb)

    kernel = functools.partial(_value_head_kernel, n1=n1, n2=n2,
                               num_out=num_out, off2=off2, off3=off3)
    out = pl.pallas_call(
        kernel,
        out_shape=jax.ShapeDtypeStruct((B, num_out), jnp.float32),
        grid=(grid,),
        in_specs=[
            pl.BlockSpec((tb, K), lambda i: (i, 0)),              # x tile (pipelined)
            pl.BlockSpec((K, n1), lambda i: (0, 0)),              # weights: VMEM-resident
            pl.BlockSpec((n1, n2), lambda i: (0, 0)),
            pl.BlockSpec((num_out, n2), lambda i: (0, 0)),
            pl.BlockSpec((1, shift.shape[1]), lambda i: (0, 0)),
        ],
        # Ragged last tile: Pallas masks writes past row B, so no wrapper-side slice.
        out_specs=pl.BlockSpec((tb, num_out), lambda i: (i, 0)),
        compiler_params=pltpu.CompilerParams(
            dimension_semantics=("parallel",),
            # tb=4096 uses ~20 MiB; leave headroom but re-check before block_b >~ 8192
            # (v7x has only 64 MiB physical VMEM).
            vmem_limit_bytes=64 * 1024 * 1024,
        ),
    )(xf, w1, w2, w3, shift)

    return out                                                    # [B, num_out]


# ----------------------------------------------------------------------------
# Pure-JAX reference (mirrors the PyTorch forward, eval mode) for verification
# ----------------------------------------------------------------------------
def value_head_reference(x, p):
    eps = 1e-5
    out = lax.conv_general_dilated(
        x, p["conv_w"], window_strides=(1, 1), padding=((1, 1), (1, 1)),
        dimension_numbers=("NCHW", "OIHW", "NCHW"))
    out = out + p["conv_b"][None, :, None, None]
    out = (out - p["mean1"][None, :, None, None]) / jnp.sqrt(p["var1"][None, :, None, None] + eps)
    out = out * p["gamma1"][None, :, None, None] + p["beta1"][None, :, None, None]
    out = jnp.maximum(out, 0.0)
    out = out.reshape(x.shape[0], -1)                              # channel-major flatten
    out = out @ p["w2"].T + p["b2"]
    out = (out - p["mean2"]) / jnp.sqrt(p["var2"] + eps) * p["gamma2"] + p["beta2"]
    out = jnp.maximum(out, 0.0)
    out = out @ p["w3"].T + p["b3"]
    return jnp.tanh(out)


if __name__ == "__main__":
    B, num_in, num_feats, num_out = 2, 4, 8, 1   # 3x3 board => Flatten gives 9*num_feats

    key = jax.random.PRNGKey(0)
    ks = jax.random.split(key, 16)
    F, Cin = num_feats, num_in
    params = {
        "conv_w": 0.1 * jax.random.normal(ks[0], (F, Cin, 3, 3), jnp.float32),
        "conv_b": 0.1 * jax.random.normal(ks[1], (F,), jnp.float32),
        "gamma1": 1.0 + 0.1 * jax.random.normal(ks[2], (F,), jnp.float32),
        "beta1": 0.1 * jax.random.normal(ks[3], (F,), jnp.float32),
        "mean1": 0.1 * jax.random.normal(ks[4], (F,), jnp.float32),
        "var1": 1.0 + 0.1 * jnp.abs(jax.random.normal(ks[5], (F,), jnp.float32)),
        "w2": 0.1 * jax.random.normal(ks[6], (2 * F, 9 * F), jnp.float32),
        "b2": 0.1 * jax.random.normal(ks[7], (2 * F,), jnp.float32),
        "gamma2": 1.0 + 0.1 * jax.random.normal(ks[8], (2 * F,), jnp.float32),
        "beta2": 0.1 * jax.random.normal(ks[9], (2 * F,), jnp.float32),
        "mean2": 0.1 * jax.random.normal(ks[10], (2 * F,), jnp.float32),
        "var2": 1.0 + 0.1 * jnp.abs(jax.random.normal(ks[11], (2 * F,), jnp.float32)),
        "w3": 0.1 * jax.random.normal(ks[12], (num_out, 2 * F), jnp.float32),
        "b3": 0.1 * jax.random.normal(ks[13], (num_out,), jnp.float32),
    }
    x = jax.random.normal(ks[14], (B, num_in, 3, 3), jnp.float32)

    ref = jax.block_until_ready(value_head_reference(x, params))
    fwd = jax.jit(value_head_forward)

    # f32-weight path (structural check; tolerance covers TPU default matmul precision).
    prepped_f32 = prepare_value_head_params(params, dtype=jnp.float32)
    out_f32 = jax.block_until_ready(fwd(x, prepped_f32))
    assert out_f32.shape == (B, num_out) and out_f32.dtype == jnp.float32
    assert jnp.allclose(out_f32, ref, rtol=1e-2, atol=1e-2), (out_f32, ref)

    # Default bf16-MXU path (f32 accumulation / elementwise): bf16-appropriate tolerance.
    prepped_bf16 = prepare_value_head_params(params)   # dtype=jnp.bfloat16
    out_bf16 = jax.block_until_ready(fwd(x, prepped_bf16))
    assert out_bf16.shape == (B, num_out) and out_bf16.dtype == jnp.float32
    assert jnp.allclose(out_bf16, ref, rtol=2.5e-2, atol=2.5e-2), (out_bf16, ref)

    # Larger, non-multiple batch: exercises the >=2-tile grid (megacore split on v7x)
    # and the ragged last tile (masked output writeback, no wrapper-side pad/slice).
    B2 = 1500
    x2 = jax.random.normal(ks[15], (B2, num_in, 3, 3), jnp.float32)
    ref2 = jax.block_until_ready(value_head_reference(x2, params))
    out2 = jax.block_until_ready(fwd(x2, prepped_bf16))
    assert out2.shape == (B2, num_out) and out2.dtype == jnp.float32
    assert jnp.allclose(out2, ref2, rtol=2.5e-2, atol=2.5e-2), \
        float(jnp.max(jnp.abs(out2 - ref2)))

    print("KERNEL_OK")
</pallas_src>

<mosaic_0001>
module attributes {stable_mosaic.version = 11 : i64} {
  func.func @_value_head_kernel(%arg0: i32, %arg1: memref<2x36xf32, #tpu.memory_space<vmem>>, %arg2: memref<36x72xf32, #tpu.memory_space<vmem>>, %arg3: memref<72x16xf32, #tpu.memory_space<vmem>>, %arg4: memref<1x16xf32, #tpu.memory_space<vmem>>, %arg5: memref<1x384xf32, #tpu.memory_space<vmem>>, %arg6: memref<2x1xf32, #tpu.memory_space<vmem>>) attributes {dimension_semantics = [#tpu.dimension_semantics<parallel>], iteration_bounds = array<i64: 1>, scalar_prefetch = 0 : i64, scratch_operands = 0 : i64, tpu.core_type = #tpu.core_type<tc>, window_params = [{transform_indices = @transform_0, window_bounds = array<i64: 2, 36>}, {pipeline_mode = #tpu.pipeline_mode<synchronous>, transform_indices = @transform_1, window_bounds = array<i64: 36, 72>}, {pipeline_mode = #tpu.pipeline_mode<synchronous>, transform_indices = @transform_2, window_bounds = array<i64: 72, 16>}, {pipeline_mode = #tpu.pipeline_mode<synchronous>, transform_indices = @transform_3, window_bounds = array<i64: 1, 16>}, {pipeline_mode = #tpu.pipeline_mode<synchronous>, transform_indices = @transform_4, window_bounds = array<i64: 1, 384>}, {transform_indices = @transform_5, window_bounds = array<i64: 2, 1>}]} {
    %c0 = arith.constant 0 : index
    %c0_0 = arith.constant 0 : index
    %0 = vector.load %arg5[%c0, %c0_0] : memref<1x384xf32, #tpu.memory_space<vmem>>, vector<1x72xf32>
    %c0_1 = arith.constant 0 : index
    %c128 = arith.constant 128 : index
    %1 = vector.load %arg5[%c0_1, %c128] : memref<1x384xf32, #tpu.memory_space<vmem>>, vector<1x16xf32>
    %c0_2 = arith.constant 0 : index
    %c256 = arith.constant 256 : index
    %2 = vector.load %arg5[%c0_2, %c256] : memref<1x384xf32, #tpu.memory_space<vmem>>, vector<1x1xf32>
    %c0_3 = arith.constant 0 : index
    %c0_4 = arith.constant 0 : index
    %3 = vector.load %arg1[%c0_3, %c0_4] : memref<2x36xf32, #tpu.memory_space<vmem>>, vector<2x36xf32>
    %c0_5 = arith.constant 0 : index
    %c0_6 = arith.constant 0 : index
    %4 = vector.load %arg2[%c0_5, %c0_6] : memref<36x72xf32, #tpu.memory_space<vmem>>, vector<36x72xf32>
    %cst = arith.constant dense<0.000000e+00> : vector<2x72xf32>
    %5 = tpu.matmul %3, %4, %cst {dimension_numbers = #tpu.dot_dimension_numbers<[1], [0], [0], [1], [0, 0, 1, 1], [], []>} : vector<2x36xf32>, vector<36x72xf32>, vector<2x72xf32> -> vector<2x72xf32>
    %6 = vector.broadcast %0 : vector<1x72xf32> to vector<2x72xf32>
    %7 = arith.addf %5, %6 : vector<2x72xf32>
    %cst_7 = arith.constant 0.000000e+00 : f32
    %8 = vector.broadcast %cst_7 : f32 to vector<2x72xf32>
    %9 = arith.maximumf %7, %8 : vector<2x72xf32>
    %c0_8 = arith.constant 0 : index
    %c0_9 = arith.constant 0 : index
    %10 = vector.load %arg3[%c0_8, %c0_9] : memref<72x16xf32, #tpu.memory_space<vmem>>, vector<72x16xf32>
    %cst_10 = arith.constant dense<0.000000e+00> : vector<2x16xf32>
    %11 = tpu.matmul %9, %10, %cst_10 {dimension_numbers = #tpu.dot_dimension_numbers<[1], [0], [0], [1], [0, 0, 1, 1], [], []>} : vector<2x72xf32>, vector<72x16xf32>, vector<2x16xf32> -> vector<2x16xf32>
    %12 = vector.broadcast %1 : vector<1x16xf32> to vector<2x16xf32>
    %13 = arith.addf %11, %12 : vector<2x16xf32>
    %cst_11 = arith.constant 0.000000e+00 : f32
    %14 = vector.broadcast %cst_11 : f32 to vector<2x16xf32>
    %15 = arith.maximumf %13, %14 : vector<2x16xf32>
    %c0_12 = arith.constant 0 : index
    %c0_13 = arith.constant 0 : index
    %16 = vector.load %arg4[%c0_12, %c0_13] : memref<1x16xf32, #tpu.memory_space<vmem>>, vector<1x16xf32>
    %17 = vector.broadcast %16 : vector<1x16xf32> to vector<2x16xf32>
    %18 = arith.mulf %15, %17 : vector<2x16xf32>
    %cst_14 = arith.constant dense<0.000000e+00> : vector<2xf32>
    %19 = vector.multi_reduction <add>, %18, %cst_14 [1] : vector<2x16xf32> to vector<2xf32>
    %20 = vector.shape_cast %19 : vector<2xf32> to vector<2x1xf32>
    %21 = vector.broadcast %2 : vector<1x1xf32> to vector<2x1xf32>
    %22 = arith.addf %20, %21 : vector<2x1xf32>
    %23 = math.tanh %22 : vector<2x1xf32>
    %c0_15 = arith.constant 0 : index
    %c0_16 = arith.constant 0 : index
    %24 = vector.load %arg6[%c0_15, %c0_16] : memref<2x1xf32, #tpu.memory_space<vmem>>, vector<2x1xf32>
    tpu.vector_store %arg6[%c0_15, %c0_16], %23 {strides = array<i32>} : memref<2x1xf32, #tpu.memory_space<vmem>>, vector<2x1xf32>,
    return
  }
  func.func @transform_0(%arg0: i32) -> (i32, i32) {
    %c0_i32 = arith.constant 0 : i32
    %c0_i32_0 = arith.constant 0 : i32
    return %arg0, %c0_i32 : i32, i32
  }
  func.func @transform_1(%arg0: i32) -> (i32, i32) {
    %c0_i32 = arith.constant 0 : i32
    %c0_i32_0 = arith.constant 0 : i32
    %c0_i32_1 = arith.constant 0 : i32
    return %c0_i32, %c0_i32_0 : i32, i32
  }
  func.func @transform_2(%arg0: i32) -> (i32, i32) {
    %c0_i32 = arith.constant 0 : i32
    %c0_i32_0 = arith.constant 0 : i32
    %c0_i32_1 = arith.constant 0 : i32
    return %c0_i32, %c0_i32_0 : i32, i32
  }
  func.func @transform_3(%arg0: i32) -> (i32, i32) {
    %c0_i32 = arith.constant 0 : i32
    %c0_i32_0 = arith.constant 0 : i32
    %c0_i32_1 = arith.constant 0 : i32
    return %c0_i32, %c0_i32_0 : i32, i32
  }
  func.func @transform_4(%arg0: i32) -> (i32, i32) {
    %c0_i32 = arith.constant 0 : i32
    %c0_i32_0 = arith.constant 0 : i32
    %c0_i32_1 = arith.constant 0 : i32
    return %c0_i32, %c0_i32_0 : i32, i32
  }
  func.func @transform_5(%arg0: i32) -> (i32, i32) {
    %c0_i32 = arith.constant 0 : i32
    %c0_i32_0 = arith.constant 0 : i32
    return %arg0, %c0_i32 : i32, i32
  }
}

</mosaic_0001>

<llo_original>
// kernel: value_head_forward.1
$region0: #{value_head_forward.1}
  #allocation0 [shape = 'u32[]', space=smem, size = 0x4, offset = 0x4, fixed_abs, tag = 'smem constant byte address 0x4 - core index']
  #allocation1 [shape = 'u32[144,128]{1,0:T(1,128)}', space=vmem, size = 0x12000, scoped, tag = 'internal scratch']
  %s0 = inlined_call_operand.vmem [shape: f32[2,36], index: 0, kind: input, shape index: {}]
  %s1 = inlined_call_operand.vmem [shape: f32[36,72], index: 1, kind: input, shape index: {}]
  %s2 = inlined_call_operand.vmem [shape: f32[72,16], index: 2, kind: input, shape index: {}]
  %s3 = inlined_call_operand.vmem [shape: f32[1,16], index: 3, kind: input, shape index: {}]
  %s4 = inlined_call_operand.vmem [shape: f32[1,384], index: 4, kind: input, shape index: {}]
  %s5 = inlined_call_operand.vmem [shape: f32[2,1], index: 5, kind: output, shape index: {}]
  %s6 = sld [smem:[#allocation0]]
  $region30: #{value_head_forward.1} parent=0
    _
  %s8 = ssub.s32 1, %s6
  %s9 = scalar_select 0, %s8, %s6
  // Predicated region
  $region2: #{value_head_forward.1} parent=0 // pred_check
    _
  $region3: #{value_head_forward.1} parent=0 // pred_check_branch
    %11 = sbr.rel (0) target = $region5
  $region4: #{value_head_forward.1} parent=0 // pred_region
    _
  $region5: #{value_head_forward.1} parent=0 // pred_fallthru
    _
  // Predicated region
  $region6: #{value_head_forward.1} parent=0 // pred_check
    _
  $region7: #{value_head_forward.1} parent=0 // pred_check_branch
    %13 = sbr.rel (0) target = $region9
  $region8: #{value_head_forward.1} parent=0 // pred_region
    _
  $region9: #{value_head_forward.1} parent=0 // pred_fallthru
    _
  // Predicated region
  $region10: #{value_head_forward.1} parent=0 // pred_check
    _
  $region11: #{value_head_forward.1} parent=0 // pred_check_branch
    %15 = sbr.rel (0) target = $region13
  $region12: #{value_head_forward.1} parent=0 // pred_region
    _
  $region13: #{value_head_forward.1} parent=0 // pred_fallthru
    _
  // Predicated region
  $region14: #{value_head_forward.1} parent=0 // pred_check
    _
  $region15: #{value_head_forward.1} parent=0 // pred_check_branch
    %17 = sbr.rel (0) target = $region17
  $region16: #{value_head_forward.1} parent=0 // pred_region
    _
  $region17: #{value_head_forward.1} parent=0 // pred_fallthru
    _
  // Predicated region
  $region18: #{value_head_forward.1} parent=0 // pred_check
    _
  $region19: #{value_head_forward.1} parent=0 // pred_check_branch
    %19 = sbr.rel (0) target = $region21
  $region20: #{value_head_forward.1} parent=0 // pred_region
    _
  $region21: #{value_head_forward.1} parent=0 // pred_fallthru
    _
  %v20 = vld [vmem:[%s4] sm:$0x1]
  %v21 = vld [vmem:[%s4 + $0x1] sm:$0x1]
  %v22 = vld [vmem:[%s4 + $0x2] sm:$0x1]
  %v23 = vld [vmem:[%s0] sm:$0x3]
  %v24 = vld [vmem:[%s1] sm:$0xff]
  %v25 = vld [vmem:[%s1 + $0x8] sm:$0xff]
  %v26 = vld [vmem:[%s1 + $0x10] sm:$0xff]
  %v27 = vld [vmem:[%s1 + $0x18] sm:$0xff]
  %v28 = vld [vmem:[%s1 + $0x20] sm:$0xf]
  %v30 = vlaneseq
  %v31 = vshrl.u32 %v30, 7
  %v32 = vsub.s32 0, %v31
  %v33 = vrot.slane %v20, %v32
  %vm35 = vcmask 293888
  %v37 = vsel %vm35, %v23, 0
  %vm39 = vcmask 1043456
  %v41 = vsel %vm39, %v28, 0
  %43 = vmatprep.subr.mxu0 0.0
  %44 = vmatpush1.msra.mxu0 0.0
  %45 = vmatprep.subr.mxu0 0.0
  %46 = vmatpush1.msra.mxu0 0.0
  %47 = vmatprep.subr.mxu0 0.0
  %48 = vmatpush1.msra.mxu0 0.0
  %49 = vmatprep.subr.mxu0 0.0
  %50 = vmatpush1.msra.mxu0 0.0
  %51 = vmatprep.subr.mxu0 0.0
  %52 = vmatpush1.msra.mxu0 0.0
  %53 = vmatprep.subr.mxu0 0.0
  %54 = vmatpush1.msra.mxu0 0.0
  %55 = vmatprep.subr.mxu0 0.0
  %56 = vmatpush1.msra.mxu0 0.0
  %57 = vmatprep.subr.mxu0 0.0
  %58 = vmatpush1.msra.mxu0 0.0
  %59 = vmatprep.subr.mxu0 0.0
  %60 = vmatpush1.msra.mxu0 0.0
  %61 = vmatprep.subr.mxu0 0.0
  %62 = vmatpush1.msra.mxu0 0.0
  %63 = vmatprep.subr.mxu0 0.0
  %64 = vmatpush1.msra.mxu0 0.0
  %65 = vmatprep.subr.mxu0 0.0
  %66 = vmatpush1.msra.mxu0 %v41
  %67 = vmatprep.subr.mxu0 0.0
  %68 = vmatpush1.msra.mxu0 %v27
  %69 = vmatprep.subr.mxu0 0.0
  %70 = vmatpush1.msra.mxu0 %v26
  %71 = vmatprep.subr.mxu0 0.0
  %72 = vmatpush1.msra.mxu0 %v25
  %73 = vmatprep.subr.mxu0 0.0
  %74 = vmatpush1.msra.mxu0 %v24
  %75 = vmatprep.subr.mxu0 0.0
  %76 = vmatpush2.msra.mxu0 0.0
  %77 = vmatprep.subr.mxu0 0.0
  %78 = vmatpush2.msra.mxu0 0.0
  %79 = vmatprep.subr.mxu0 0.0
  %80 = vmatpush2.msra.mxu0 0.0
  %81 = vmatprep.subr.mxu0 0.0
  %82 = vmatpush2.msra.mxu0 0.0
  %83 = vmatprep.subr.mxu0 0.0
  %84 = vmatpush2.msra.mxu0 0.0
  %85 = vmatprep.subr.mxu0 0.0
  %86 = vmatpush2.msra.mxu0 0.0
  %87 = vmatprep.subr.mxu0 0.0
  %88 = vmatpush2.msra.mxu0 0.0
  %89 = vmatprep.subr.mxu0 0.0
  %90 = vmatpush2.msra.mxu0 0.0
  %91 = vmatprep.subr.mxu0 0.0
  %92 = vmatpush2.msra.mxu0 0.0
  %93 = vmatprep.subr.mxu0 0.0
  %94 = vmatpush2.msra.mxu0 0.0
  %95 = vmatprep.subr.mxu0 0.0
  %96 = vmatpush2.msra.mxu0 0.0
  %97 = vmatprep.subr.mxu0 0.0
  %98 = vmatpush2.msra.mxu0 0.0
  %99 = vmatprep.subr.mxu0 0.0
  %100 = vmatpush2.msra.mxu0 0.0
  %101 = vmatprep.subr.mxu0 0.0
  %102 = vmatpush2.msra.mxu0 0.0
  %103 = vmatprep.subr.mxu0 0.0
  %104 = vmatpush2.msra.mxu0 0.0
  %105 = vmatprep.subr.mxu0 0.0
  %106 = vmatpush2.msra.mxu0 0.0
  %107 = vmatprep.mubr.f32.mxu0 0.0
  %108 = vmatmul.mubr.f32.gmra.mxu0 %v37
  %v109 = vpop.f32.mrf.mxu0
  %v110 = vadd.f32 %v33, %v109
  %v111 = vpop.f32.mrf.mxu0
  %112 = vdwg.mxu0
  %v113 = vmax.f32 %v110, 0.0
  %v114 = vld [vmem:[%s2] sm:$0xff]
  %v115 = vld [vmem:[%s2 + $0x8] sm:$0xff]
  %v116 = vld [vmem:[%s2 + $0x10] sm:$0xff]
  %v117 = vld [vmem:[%s2 + $0x18] sm:$0xff]
  %v118 = vld [vmem:[%s2 + $0x20] sm:$0xff]
  %v119 = vld [vmem:[%s2 + $0x28] sm:$0xff]
  %v120 = vld [vmem:[%s2 + $0x30] sm:$0xff]
  %v121 = vld [vmem:[%s2 + $0x38] sm:$0xff]
  %v122 = vld [vmem:[%s2 + $0x40] sm:$0xff]
  %v124 = vlaneseq
  %v125 = vshrl.u32 %v124, 7
  %v126 = vsub.s32 0, %v125
  %v127 = vrot.slane %v21, %v126
  %vm129 = vcmask 588800
  %v131 = vsel %vm129, %v113, 0
  %133 = vmatprep.subr.mxu0 0.0
  %134 = vmatpush1.msra.mxu0 0.0
  %135 = vmatprep.subr.mxu0 0.0
  %136 = vmatpush1.msra.mxu0 0.0
  %137 = vmatprep.subr.mxu0 0.0
  %138 = vmatpush1.msra.mxu0 0.0
  %139 = vmatprep.subr.mxu0 0.0
  %140 = vmatpush1.msra.mxu0 0.0
  %141 = vmatprep.subr.mxu0 0.0
  %142 = vmatpush1.msra.mxu0 0.0
  %143 = vmatprep.subr.mxu0 0.0
  %144 = vmatpush1.msra.mxu0 0.0
  %145 = vmatprep.subr.mxu0 0.0
  %146 = vmatpush1.msra.mxu0 0.0
  %147 = vmatprep.subr.mxu0 0.0
  %148 = vmatpush1.msra.mxu0 %v122
  %149 = vmatprep.subr.mxu0 0.0
  %150 = vmatpush1.msra.mxu0 %v121
  %151 = vmatprep.subr.mxu0 0.0
  %152 = vmatpush1.msra.mxu0 %v120
  %153 = vmatprep.subr.mxu0 0.0
  %154 = vmatpush1.msra.mxu0 %v119
  %155 = vmatprep.subr.mxu0 0.0
  %156 = vmatpush1.msra.mxu0 %v118
  %157 = vmatprep.subr.mxu0 0.0
  %158 = vmatpush1.msra.mxu0 %v117
  %159 = vmatprep.subr.mxu0 0.0
  %160 = vmatpush1.msra.mxu0 %v116
  %161 = vmatprep.subr.mxu0 0.0
  %162 = vmatpush1.msra.mxu0 %v115
  %163 = vmatprep.subr.mxu0 0.0
  %164 = vmatpush1.msra.mxu0 %v114
  %165 = vmatprep.subr.mxu0 0.0
  %166 = vmatpush2.msra.mxu0 0.0
  %167 = vmatprep.subr.mxu0 0.0
  %168 = vmatpush2.msra.mxu0 0.0
  %169 = vmatprep.subr.mxu0 0.0
  %170 = vmatpush2.msra.mxu0 0.0
  %171 = vmatprep.subr.mxu0 0.0
  %172 = vmatpush2.msra.mxu0 0.0
  %173 = vmatprep.subr.mxu0 0.0
  %174 = vmatpush2.msra.mxu0 0.0
  %175 = vmatprep.subr.mxu0 0.0
  %176 = vmatpush2.msra.mxu0 0.0
  %177 = vmatprep.subr.mxu0 0.0
  %178 = vmatpush2.msra.mxu0 0.0
  %179 = vmatprep.subr.mxu0 0.0
  %180 = vmatpush2.msra.mxu0 0.0
  %181 = vmatprep.subr.mxu0 0.0
  %182 = vmatpush2.msra.mxu0 0.0
  %183 = vmatprep.subr.mxu0 0.0
  %184 = vmatpush2.msra.mxu0 0.0
  %185 = vmatprep.subr.mxu0 0.0
  %186 = vmatpush2.msra.mxu0 0.0
  %187 = vmatprep.subr.mxu0 0.0
  %188 = vmatpush2.msra.mxu0 0.0
  %189 = vmatprep.subr.mxu0 0.0
  %190 = vmatpush2.msra.mxu0 0.0
  %191 = vmatprep.subr.mxu0 0.0
  %192 = vmatpush2.msra.mxu0 0.0
  %193 = vmatprep.subr.mxu0 0.0
  %194 = vmatpush2.msra.mxu0 0.0
  %195 = vmatprep.subr.mxu0 0.0
  %196 = vmatpush2.msra.mxu0 0.0
  %197 = vmatprep.mubr.f32.mxu0 0.0
  %198 = vmatmul.mubr.f32.gmra.mxu0 %v131
  %v199 = vpop.f32.mrf.mxu0
  %v200 = vadd.f32 %v127, %v199
  %v201 = vpop.f32.mrf.mxu0
  %202 = vdwg.mxu0
  %v203 = vmax.f32 %v200, 0.0
  %v204 = vld [vmem:[%s3] sm:$0x1]
  %v206 = vlaneseq
  %v207 = vshrl.u32 %v206, 7
  %v208 = vsub.s32 0, %v207
  %v209 = vrot.slane %v204, %v208
  %v211 = vmul.f32 %v203, %v209
  %vm212 = vcmask 123904
  %v213 = vsel %vm212, %v211, 0.0
  %214 = vadd.xlane.f32.xlu0 %v213
  %v215 = vpop.xlane.xlu0 %214
  %v217 = vlaneseq
  %v218 = vshrl.u32 %v217, 7
  %v219 = vsub.s32 0, %v218
  %v220 = vrot.slane %v22, %v219
  %v222 = vadd.f32 %v215, %v220
  %v223 = vtanh.pop %v222
  %vm224 = vcmask 1024
  %225 = vst.msk [vmem:[%s5] sm:$0x3] %vm224, %v223
  // Predicated region
  $region22: #{value_head_forward.1} parent=0 // pred_check
    _
  $region23: #{value_head_forward.1} parent=0 // pred_check_branch
    %227 = sbr.rel (0) target = $region25
  $region24: #{value_head_forward.1} parent=0 // pred_region
    _
  $region25: #{value_head_forward.1} parent=0 // pred_fallthru
    _
  // Predicated region
  $region26: #{value_head_forward.1} parent=0 // pred_check
    _
  $region27: #{value_head_forward.1} parent=0 // pred_check_branch
    %229 = sbr.rel (0) target = $region29
  $region28: #{value_head_forward.1} parent=0 // pred_region
    _
  $region29: #{value_head_forward.1} parent=0 // pred_fallthru
    _

</llo_original>
